<compile_context>
chip_gen: v6e
topology: v6e:2x2x1
jax: 0.10.0
libtpu: 0.0.40
codegen_flags: <defaults>
</compile_context>

<pallas_src>
import jax
import jax.numpy as jnp
from jax.experimental import pallas as pl
from jax.experimental.pallas import tpu as pltpu


def _round_up(x, m):
    return ((x + m - 1) // m) * m


def _choose_tiles(m, k, n):
    # Sublane-aligned M tile, lane-dense K/N tiles; capped so the double-
    # buffered working set stays far below v7x's 64 MiB VMEM.
    tm = min(256, _round_up(m, 8))
    tk = min(512, _round_up(k, 128))
    tn = min(256, _round_up(n, 128))
    return tm, tk, tn


def qy_kernel(zy_ref, w_ref, b_ref, out_ref, acc_ref):
    k = pl.program_id(2)

    @pl.when(k == 0)
    def _():
        acc_ref[...] = jnp.zeros_like(acc_ref)

    # ReLU (VPU) is cheap and hidden under the MXU; recomputed per N tile.
    h = jnp.maximum(zy_ref[...], 0.0)
    # Contract zy's K dim against weight's K dim: weight block is (tn, tk),
    # i.e. PyTorch (y_dim, zy_dim) layout — no transpose materialized in HBM.
    acc_ref[...] += jax.lax.dot_general(
        h,
        w_ref[...],
        dimension_numbers=(((1,), (1,)), ((), ())),
        preferred_element_type=jnp.float32,
    )

    # Bias add + dtype cast once per output tile, in the K-last finalize.
    @pl.when(k == pl.num_programs(2) - 1)
    def _():
        out_ref[...] = (acc_ref[...] + b_ref[...]).astype(out_ref.dtype)


def qy_forward(zy, weight, bias):
    """zy: (B, zy_dim); weight: (y_dim, zy_dim); bias: (y_dim,)."""
    B, zy_dim = zy.shape
    y_dim = weight.shape[0]

    tm, tk, tn = _choose_tiles(B, zy_dim, y_dim)
    Mp = _round_up(B, tm)
    Kp = _round_up(zy_dim, tk)
    Np = _round_up(y_dim, tn)

    # Zero-pad to tile multiples (lane-dense last dims).  Zeros are exact
    # no-ops for relu + matmul; padded output rows/cols are sliced off.
    zy_p = zy
    if (Mp, Kp) != (B, zy_dim):
        zy_p = jnp.pad(zy, ((0, Mp - B), (0, Kp - zy_dim)))
    w_p = weight
    if (Np, Kp) != (y_dim, zy_dim):
        w_p = jnp.pad(weight, ((0, Np - y_dim), (0, Kp - zy_dim)))
    b_p = bias if Np == y_dim else jnp.pad(bias, (0, Np - y_dim))
    b2 = b_p.reshape(1, Np)

    grid = (Mp // tm, Np // tn, Kp // tk)  # K innermost (reduction axis)

    # VMEM budget: double-buffered inputs + output, plus the accumulator.
    vmem_needed = 4 * (2 * (tm * tk + tn * tk + tn) + 2 * tm * tn + tm * tn)
    vmem_limit = min(2 * vmem_needed + (8 << 20), 48 << 20)

    out_p = pl.pallas_call(
        qy_kernel,
        out_shape=jax.ShapeDtypeStruct((Mp, Np), zy.dtype),
        grid=grid,
        in_specs=[
            pl.BlockSpec((tm, tk), lambda i, j, k: (i, k)),
            pl.BlockSpec((tn, tk), lambda i, j, k: (j, k)),
            pl.BlockSpec((1, tn), lambda i, j, k: (0, j)),
        ],
        out_specs=pl.BlockSpec((tm, tn), lambda i, j, k: (i, j)),
        scratch_shapes=[pltpu.VMEM((tm, tn), jnp.float32)],
        compiler_params=pltpu.CompilerParams(
            dimension_semantics=("parallel", "parallel", "arbitrary"),
            vmem_limit_bytes=vmem_limit,
        ),
        cost_estimate=pl.CostEstimate(
            flops=2 * Mp * Kp * Np,
            transcendentals=0,
            bytes_accessed=4 * (Mp * Kp + Np * Kp + Mp * Np + Np),
        ),
    )(zy_p, w_p, b2)

    return out_p[:B, :y_dim]


def init_params(key, zy_dim, y_dim):
    # Xavier-uniform for fc1.weight (shape (y_dim, zy_dim)), zero bias —
    # matches torch.nn.init.xavier_uniform_ + bias.data.zero_().
    limit = jnp.sqrt(6.0 / (zy_dim + y_dim))
    weight = jax.random.uniform(
        key, (y_dim, zy_dim), dtype=jnp.float32, minval=-limit, maxval=limit
    )
    bias = jnp.zeros((y_dim,), dtype=jnp.float32)
    return weight, bias


def _reference(zy, weight, bias):
    h = jnp.maximum(zy, 0.0)
    return (
        jnp.matmul(h, weight.T, precision=jax.lax.Precision.HIGHEST) + bias
    )


if __name__ == "__main__":
    key = jax.random.PRNGKey(0)
    k_zy, k_w, k_zy2, k_w2 = jax.random.split(key, 4)

    # Small shapes matching the module's toy configuration.
    batch, zy_dim, y_dim = 8, 32, 16
    zy = jax.random.normal(k_zy, (batch, zy_dim), dtype=jnp.float32)
    weight, bias = init_params(k_w, zy_dim, y_dim)

    out = qy_forward(zy, weight, bias)
    out = jax.block_until_ready(out)
    ref = _reference(zy, weight, bias)
    assert out.shape == (batch, y_dim)
    assert jnp.allclose(out, ref, atol=1e-5, rtol=1e-5)

    # Larger shapes that exercise the full 2x2x2 tiled grid (M/N padding,
    # K-axis accumulation, parallel M/N axes).
    b2_, k2_, n2_ = 384, 1024, 384
    zy2 = jax.random.normal(k_zy2, (b2_, k2_), dtype=jnp.float32)
    w2, bi2 = init_params(k_w2, k2_, n2_)
    out2 = jax.block_until_ready(qy_forward(zy2, w2, bi2))
    ref2 = _reference(zy2, w2, bi2)
    assert out2.shape == (b2_, n2_)
    assert jnp.allclose(out2, ref2, atol=2e-3, rtol=2e-3)

    print("KERNEL_OK")
</pallas_src>

<mosaic_0001>
module attributes {stable_mosaic.version = 11 : i64} {
  func.func @qy_kernel(%arg0: i32, %arg1: i32, %arg2: i32, %arg3: memref<8x128xf32, #tpu.memory_space<vmem>>, %arg4: memref<128x128xf32, #tpu.memory_space<vmem>>, %arg5: memref<1x128xf32, #tpu.memory_space<vmem>>, %arg6: memref<8x128xf32, #tpu.memory_space<vmem>>, %arg7: memref<8x128xf32, #tpu.memory_space<vmem>>) attributes {dimension_semantics = [#tpu.dimension_semantics<parallel>, #tpu.dimension_semantics<parallel>, #tpu.dimension_semantics<arbitrary>], iteration_bounds = array<i64: 1, 1, 1>, scalar_prefetch = 0 : i64, scratch_operands = 1 : i64, tpu.core_type = #tpu.core_type<tc>, window_params = [{transform_indices = @transform_0, window_bounds = array<i64: 8, 128>}, {transform_indices = @transform_1, window_bounds = array<i64: 128, 128>}, {transform_indices = @transform_2, window_bounds = array<i64: 1, 128>}, {transform_indices = @transform_3, window_bounds = array<i64: 8, 128>}]} {
    %c0_i32 = arith.constant 0 : i32
    %0 = arith.cmpi eq, %arg2, %c0_i32 : i32
    %1 = arith.extui %0 : i1 to i32
    %c0_i32_0 = arith.constant 0 : i32
    %2 = arith.cmpi ne, %1, %c0_i32_0 : i32
    scf.if %2 {
      %cst_11 = arith.constant 0.000000e+00 : f32
      %14 = vector.broadcast %cst_11 : f32 to vector<8x128xf32>
      %c0_12 = arith.constant 0 : index
      %c0_13 = arith.constant 0 : index
      %15 = vector.load %arg7[%c0_12, %c0_13] : memref<8x128xf32, #tpu.memory_space<vmem>>, vector<8x128xf32>
      tpu.vector_store %arg7[%c0_12, %c0_13], %14 {strides = array<i32>} : memref<8x128xf32, #tpu.memory_space<vmem>>, vector<8x128xf32>,
    } else {
    }
    %c0 = arith.constant 0 : index
    %c0_1 = arith.constant 0 : index
    %3 = vector.load %arg3[%c0, %c0_1] : memref<8x128xf32, #tpu.memory_space<vmem>>, vector<8x128xf32>
    %cst = arith.constant 0.000000e+00 : f32
    %4 = vector.broadcast %cst : f32 to vector<8x128xf32>
    %5 = arith.maximumf %3, %4 : vector<8x128xf32>
    %c0_2 = arith.constant 0 : index
    %c0_3 = arith.constant 0 : index
    %6 = vector.load %arg7[%c0_2, %c0_3] : memref<8x128xf32, #tpu.memory_space<vmem>>, vector<8x128xf32>
    %c0_4 = arith.constant 0 : index
    %c0_5 = arith.constant 0 : index
    %7 = vector.load %arg4[%c0_4, %c0_5] : memref<128x128xf32, #tpu.memory_space<vmem>>, vector<128x128xf32>
    %cst_6 = arith.constant dense<0.000000e+00> : vector<8x128xf32>
    %8 = tpu.matmul %5, %7, %cst_6 {dimension_numbers = #tpu.dot_dimension_numbers<[1], [1], [0], [0], [0, 0, 1, 0], [], []>} : vector<8x128xf32>, vector<128x128xf32>, vector<8x128xf32> -> vector<8x128xf32>
    %9 = arith.addf %6, %8 : vector<8x128xf32>
    %c0_7 = arith.constant 0 : index
    %c0_8 = arith.constant 0 : index
    %10 = vector.load %arg7[%c0_7, %c0_8] : memref<8x128xf32, #tpu.memory_space<vmem>>, vector<8x128xf32>
    tpu.vector_store %arg7[%c0_7, %c0_8], %9 {strides = array<i32>} : memref<8x128xf32, #tpu.memory_space<vmem>>, vector<8x128xf32>,
    %c0_i32_9 = arith.constant 0 : i32
    %11 = arith.cmpi eq, %arg2, %c0_i32_9 : i32
    %12 = arith.extui %11 : i1 to i32
    %c0_i32_10 = arith.constant 0 : i32
    %13 = arith.cmpi ne, %12, %c0_i32_10 : i32
    scf.if %13 {
      %c0_11 = arith.constant 0 : index
      %c0_12 = arith.constant 0 : index
      %14 = vector.load %arg7[%c0_11, %c0_12] : memref<8x128xf32, #tpu.memory_space<vmem>>, vector<8x128xf32>
      %c0_13 = arith.constant 0 : index
      %c0_14 = arith.constant 0 : index
      %15 = vector.load %arg5[%c0_13, %c0_14] : memref<1x128xf32, #tpu.memory_space<vmem>>, vector<1x128xf32>
      %16 = vector.broadcast %15 : vector<1x128xf32> to vector<8x128xf32>
      %17 = arith.addf %14, %16 : vector<8x128xf32>
      %c0_15 = arith.constant 0 : index
      %c0_16 = arith.constant 0 : index
      %18 = vector.load %arg6[%c0_15, %c0_16] : memref<8x128xf32, #tpu.memory_space<vmem>>, vector<8x128xf32>
      tpu.vector_store %arg6[%c0_15, %c0_16], %17 {strides = array<i32>} : memref<8x128xf32, #tpu.memory_space<vmem>>, vector<8x128xf32>,
    } else {
    }
    return
  }
  func.func @transform_0(%arg0: i32, %arg1: i32, %arg2: i32) -> (i32, i32) {
    %c0_i32 = arith.constant 0 : i32
    return %arg0, %arg2 : i32, i32
  }
  func.func @transform_1(%arg0: i32, %arg1: i32, %arg2: i32) -> (i32, i32) {
    %c0_i32 = arith.constant 0 : i32
    return %arg1, %arg2 : i32, i32
  }
  func.func @transform_2(%arg0: i32, %arg1: i32, %arg2: i32) -> (i32, i32) {
    %c0_i32 = arith.constant 0 : i32
    %c0_i32_0 = arith.constant 0 : i32
    return %c0_i32, %arg1 : i32, i32
  }
  func.func @transform_3(%arg0: i32, %arg1: i32, %arg2: i32) -> (i32, i32) {
    %c0_i32 = arith.constant 0 : i32
    return %arg0, %arg1 : i32, i32
  }
}

</mosaic_0001>

<llo_original>
// kernel: tpu_custom_call.1
$region0: #{tpu_custom_call.1}
  #allocation0 [shape = 'u32[]', space=smem, size = 0x4, offset = 0x4, fixed_abs, tag = 'smem constant byte address 0x4 - core index']
  #allocation1 [shape = 'u32[144,128]{1,0:T(1,128)}', space=vmem, size = 0x12000, scoped, tag = 'internal scratch']
  #allocation2 [shape = 'f32[8,128]{1,0:T(8,128)}', space=vmem, size = 0x1000, scoped, tag = 'scratch operand']
  %s0 = inlined_call_operand.hbm [shape: f32[8,128], index: 0, kind: input, shape index: {}]
  %s1 = inlined_call_operand.hbm [shape: f32[128,128], index: 1, kind: input, shape index: {}]
  %s2 = inlined_call_operand.vmem [shape: f32[1,128], index: 2, kind: input, shape index: {}]
  %s3 = inlined_call_operand.hbm [shape: f32[8,128], index: 3, kind: output, shape index: {}]
  %s4 = sld [smem:[#allocation0]]
  $region38: #{tpu_custom_call.1} parent=0
    _
  %s6 = ssub.s32 1, %s4
  %s7 = scalar_select 0, %s6, %s4
  $region1: #{tpu_custom_call.1} parent=0
    #allocation3 [shape = 'u8[4096]{0}', space=vmem, size = 0x1000, scoped, tag = 'input window, operand 0, single buffered']
    #allocation4 [shape = 's32[1]{0}', space=sflag, size = 0x4, scoped, tag = 'scoped memory for tpu_custom_call.1']
    #allocation5 [shape = 's32[1]{0}', space=sflag, size = 0x4, scoped, tag = 'scoped memory for tpu_custom_call.1']
    #allocation6 [shape = 'u8[65536]{0}', space=vmem, size = 0x10000, scoped, tag = 'input window, operand 1, single buffered']
    #allocation7 [shape = 's32[1]{0}', space=sflag, size = 0x4, scoped, tag = 'scoped memory for tpu_custom_call.1']
    #allocation8 [shape = 'u8[4096]{0}', space=vmem, size = 0x1000, scoped, tag = 'output window, operand 0, single buffered']
    %8 = vsyncpa [#allocation4], 0
    %9 = vsyncpa [#allocation7], 0
    %10 = vsyncpa [#allocation5], 0
    // Predicated region
    $region2: #{tpu_custom_call.1} parent=1 // pred_check
      _
    $region3: #{tpu_custom_call.1} parent=1 // pred_check_branch
      %12 = sbr.rel (0) target = $region5
    $region4: #{tpu_custom_call.1} parent=1 // pred_region
      %s14 = ssub.s32 128, 128
      %15 = vsyncadd [#allocation4], %s14
      %s17 = sshll.u32 [#allocation3], 4
      %s18 = int_to_ptr.vmem [resolvable:$true] %s17
      %20 = dma.hbm_to_vmem [thread:$0]  %s0, 128, %s18, [#allocation4]
    $region5: #{tpu_custom_call.1} parent=1 // pred_fallthru
      _
    // Predicated region
    $region6: #{tpu_custom_call.1} parent=1 // pred_check
      _
    $region7: #{tpu_custom_call.1} parent=1 // pred_check_branch
      %22 = sbr.rel (0) target = $region9
    $region8: #{tpu_custom_call.1} parent=1 // pred_region
      %s24 = ssub.s32 2048, 2048
      %25 = vsyncadd [#allocation7], %s24
      %s26 = sshll.u32 [#allocation6], 4
      %s27 = int_to_ptr.vmem [resolvable:$true] %s26
      %32 = dma.hbm_to_vmem [thread:$0]  %s1, 2048, %s27, [#allocation7], 128, 128, 8
    $region9: #{tpu_custom_call.1} parent=1 // pred_fallthru
      _
    // Predicated region
    $region10: #{tpu_custom_call.1} parent=1 // pred_check
      _
    $region11: #{tpu_custom_call.1} parent=1 // pred_check_branch
      %34 = sbr.rel (0) target = $region13
    $region12: #{tpu_custom_call.1} parent=1 // pred_region
      _
    $region13: #{tpu_custom_call.1} parent=1 // pred_fallthru
      _
    // Predicated region
    $region14: #{tpu_custom_call.1} parent=1 // pred_check
      _
    $region15: #{tpu_custom_call.1} parent=1 // pred_check_branch
      %36 = sbr.rel (0) target = $region17
    $region16: #{tpu_custom_call.1} parent=1 // pred_region
      %37 = dma.done [#allocation4], 128
    $region17: #{tpu_custom_call.1} parent=1 // pred_fallthru
      _
    // Predicated region
    $region18: #{tpu_custom_call.1} parent=1 // pred_check
      _
    $region19: #{tpu_custom_call.1} parent=1 // pred_check_branch
      %39 = sbr.rel (0) target = $region21
    $region20: #{tpu_custom_call.1} parent=1 // pred_region
      %40 = dma.done [#allocation7], 2048
    $region21: #{tpu_custom_call.1} parent=1 // pred_fallthru
      _
    %p41 = scmp.eq.s32.totalorder 0, 0
    // Predicated region
    $region22: #{tpu_custom_call.1} parent=1 // pred_check
      %p42 = pneg %p41
    $region23: #{tpu_custom_call.1} parent=1 // pred_check_branch
      %44 = sbr.rel (%p42) target = $region25
    $region24: #{tpu_custom_call.1} parent=1 // pred_region
      %45 = vst [vmem:[#allocation2] sm:$0xff] 0.0
    $region25: #{tpu_custom_call.1} parent=1 // pred_fallthru
      _
    %v46 = vld [vmem:[#allocation3] sm:$0xff]
    %v47 = vmax.f32 %v46, 0.0
    %v48 = vld [vmem:[#allocation2] sm:$0xff]
    %v49 = vld [vmem:[#allocation6] sm:$0xff]
    %v50 = vld [vmem:[#allocation6 + $0x8] sm:$0xff]
    %v51 = vld [vmem:[#allocation6 + $0x10] sm:$0xff]
    %v52 = vld [vmem:[#allocation6 + $0x18] sm:$0xff]
    %v53 = vld [vmem:[#allocation6 + $0x20] sm:$0xff]
    %v54 = vld [vmem:[#allocation6 + $0x28] sm:$0xff]
    %v55 = vld [vmem:[#allocation6 + $0x30] sm:$0xff]
    %v56 = vld [vmem:[#allocation6 + $0x38] sm:$0xff]
    %v57 = vld [vmem:[#allocation6 + $0x40] sm:$0xff]
    %v58 = vld [vmem:[#allocation6 + $0x48] sm:$0xff]
    %v59 = vld [vmem:[#allocation6 + $0x50] sm:$0xff]
    %v60 = vld [vmem:[#allocation6 + $0x58] sm:$0xff]
    %v61 = vld [vmem:[#allocation6 + $0x60] sm:$0xff]
    %v62 = vld [vmem:[#allocation6 + $0x68] sm:$0xff]
    %v63 = vld [vmem:[#allocation6 + $0x70] sm:$0xff]
    %v64 = vld [vmem:[#allocation6 + $0x78] sm:$0xff]
    %65 = vmatprep.subr.mxu0 0.0
    %66 = vmatpush1.xpose.msra.mxu0 %v64
    %67 = vmatprep.subr.mxu0 0.0
    %68 = vmatpush1.xpose.msra.mxu0 %v63
    %69 = vmatprep.subr.mxu0 0.0
    %70 = vmatpush1.xpose.msra.mxu0 %v62
    %71 = vmatprep.subr.mxu0 0.0
    %72 = vmatpush1.xpose.msra.mxu0 %v61
    %73 = vmatprep.subr.mxu0 0.0
    %74 = vmatpush1.xpose.msra.mxu0 %v60
    %75 = vmatprep.subr.mxu0 0.0
    %76 = vmatpush1.xpose.msra.mxu0 %v59
    %77 = vmatprep.subr.mxu0 0.0
    %78 = vmatpush1.xpose.msra.mxu0 %v58
    %79 = vmatprep.subr.mxu0 0.0
    %80 = vmatpush1.xpose.msra.mxu0 %v57
    %81 = vmatprep.subr.mxu0 0.0
    %82 = vmatpush1.xpose.msra.mxu0 %v56
    %83 = vmatprep.subr.mxu0 0.0
    %84 = vmatpush1.xpose.msra.mxu0 %v55
    %85 = vmatprep.subr.mxu0 0.0
    %86 = vmatpush1.xpose.msra.mxu0 %v54
    %87 = vmatprep.subr.mxu0 0.0
    %88 = vmatpush1.xpose.msra.mxu0 %v53
    %89 = vmatprep.subr.mxu0 0.0
    %90 = vmatpush1.xpose.msra.mxu0 %v52
    %91 = vmatprep.subr.mxu0 0.0
    %92 = vmatpush1.xpose.msra.mxu0 %v51
    %93 = vmatprep.subr.mxu0 0.0
    %94 = vmatpush1.xpose.msra.mxu0 %v50
    %95 = vmatprep.subr.mxu0 0.0
    %96 = vmatpush1.xpose.msra.mxu0 %v49
    %97 = vmatprep.subr.mxu0 0.0
    %98 = vmatpush2.xpose.msra.mxu0 0.0
    %99 = vmatprep.subr.mxu0 0.0
    %100 = vmatpush2.xpose.msra.mxu0 0.0
    %101 = vmatprep.subr.mxu0 0.0
    %102 = vmatpush2.xpose.msra.mxu0 0.0
    %103 = vmatprep.subr.mxu0 0.0
    %104 = vmatpush2.xpose.msra.mxu0 0.0
    %105 = vmatprep.subr.mxu0 0.0
    %106 = vmatpush2.xpose.msra.mxu0 0.0
    %107 = vmatprep.subr.mxu0 0.0
    %108 = vmatpush2.xpose.msra.mxu0 0.0
    %109 = vmatprep.subr.mxu0 0.0
    %110 = vmatpush2.xpose.msra.mxu0 0.0
    %111 = vmatprep.subr.mxu0 0.0
    %112 = vmatpush2.xpose.msra.mxu0 0.0
    %113 = vmatprep.subr.mxu0 0.0
    %114 = vmatpush2.xpose.msra.mxu0 0.0
    %115 = vmatprep.subr.mxu0 0.0
    %116 = vmatpush2.xpose.msra.mxu0 0.0
    %117 = vmatprep.subr.mxu0 0.0
    %118 = vmatpush2.xpose.msra.mxu0 0.0
    %119 = vmatprep.subr.mxu0 0.0
    %120 = vmatpush2.xpose.msra.mxu0 0.0
    %121 = vmatprep.subr.mxu0 0.0
    %122 = vmatpush2.xpose.msra.mxu0 0.0
    %123 = vmatprep.subr.mxu0 0.0
    %124 = vmatpush2.xpose.msra.mxu0 0.0
    %125 = vmatprep.subr.mxu0 0.0
    %126 = vmatpush2.xpose.msra.mxu0 0.0
    %127 = vmatprep.subr.mxu0 0.0
    %128 = vmatpush2.xpose.msra.mxu0 0.0
    %129 = vmatprep.mubr.f32.mxu0 0.0
    %130 = vmatmul.mubr.f32.gmra.mxu0 %v47
    %v131 = vpop.f32.mrf.mxu0
    %v132 = vadd.f32 0.0, %v131
    %v133 = vpop.f32.mrf.mxu0
    %134 = vdwg.mxu0
    %v135 = vadd.f32 %v48, %v132
    %136 = vst [vmem:[#allocation2] sm:$0xff] %v135
    // Predicated region
    $region26: #{tpu_custom_call.1} parent=1 // pred_check
      %p137 = pneg %p41
    $region27: #{tpu_custom_call.1} parent=1 // pred_check_branch
      %139 = sbr.rel (%p137) target = $region29
    $region28: #{tpu_custom_call.1} parent=1 // pred_region
      %v140 = vld [vmem:[#allocation2] sm:$0xff]
      %v141 = vld [vmem:[%s2] sm:$0x1]
      %v143 = vlaneseq
      %v144 = vshrl.u32 %v143, 7
      %v145 = vsub.s32 0, %v144
      %v146 = vrot.slane %v141, %v145
      %v148 = vadd.f32 %v140, %v146
      %149 = vst [vmem:[#allocation8] sm:$0xff] %v148
    $region29: #{tpu_custom_call.1} parent=1 // pred_fallthru
      _
    // Predicated region
    $region30: #{tpu_custom_call.1} parent=1 // pred_check
      _
    $region31: #{tpu_custom_call.1} parent=1 // pred_check_branch
      %151 = sbr.rel (0) target = $region33
    $region32: #{tpu_custom_call.1} parent=1 // pred_region
      %s153 = ssub.s32 128, 128
      %154 = vsyncadd [#allocation5], %s153
      %s156 = sshll.u32 [#allocation8], 4
      %s157 = int_to_ptr.vmem [resolvable:$true] %s156
      %159 = dma.vmem_to_hbm [thread:$0]  %s157, 128, %s3, [#allocation5]
    $region33: #{tpu_custom_call.1} parent=1 // pred_fallthru
      _
    // Predicated region
    $region34: #{tpu_custom_call.1} parent=1 // pred_check
      _
    $region35: #{tpu_custom_call.1} parent=1 // pred_check_branch
      %161 = sbr.rel (0) target = $region37
    $region36: #{tpu_custom_call.1} parent=1 // pred_region
      %162 = dma.done [#allocation5], 128
    $region37: #{tpu_custom_call.1} parent=1 // pred_fallthru
      _
    %163 = vsyncpa [#allocation4], 1
    %164 = vsyncpa [#allocation7], 1
    %165 = vsyncpa [#allocation5], 1

</llo_original>
